<compile_context>
chip_gen: v7x
topology: tpu7x:2x2x1
jax: 0.10.0
libtpu: 0.0.40
codegen_flags: <defaults>
</compile_context>

<pallas_src>
import functools

import jax
import jax.numpy as jnp
from jax.experimental import pallas as pl
from jax.experimental.pallas import tpu as pltpu


def _round_up(x, m):
    return ((x + m - 1) // m) * m


def _dispersion_kernel(x_ref, o_ref, acc_ref, *, inv_n):
    # grid = (num_c_tiles, num_n_tiles); axis 1 (batch tiles) is the reduction.
    i = pl.program_id(1)

    @pl.when(i == 0)
    def _():
        acc_ref[...] = jnp.zeros_like(acc_ref)

    x = x_ref[...].astype(jnp.float32)                    # (tile_n, tile_c)
    acc_ref[...] += jnp.sum(x, axis=0, keepdims=True)     # (1, tile_c) partial batch sum

    @pl.when(i == pl.num_programs(1) - 1)
    def _():
        avg = acc_ref[...] * jnp.float32(inv_n)           # mean over the TRUE batch size
        o_ref[...] = avg * jnp.log(avg + 1e-5)            # per-class contribution


def dispersion_loss(out, *, vmem_block_bytes=4 * 1024 * 1024):
    """out: (N, ...) array. Returns scalar f32 loss matching the PyTorch module."""
    # mean over dim 0 then sum over everything else == flatten trailing dims.
    x2 = out.reshape(out.shape[0], -1)
    N, C = x2.shape
    itemsize = jnp.dtype(x2.dtype).itemsize

    # --- lane (class) tile: pad C to a multiple of 128, pick largest preferred
    #     tile that divides the padded extent (no in-kernel masking needed).
    C_pad = _round_up(C, 128)
    tile_c = 128
    for t in (2048, 1024, 512, 256, 128):
        if C_pad % t == 0:
            tile_c = t
            break

    # --- sublane (batch) tile: as large as the per-buffer VMEM budget allows,
    #     capped at 512 rows and at what the batch actually needs.
    max_elems = max(vmem_block_bytes // itemsize, 8 * 128)
    tile_n = min(512, max_elems // tile_c, _round_up(N, 8))
    tile_n = max(8, (tile_n // 8) * 8)
    N_pad = _round_up(N, tile_n)

    if (N_pad, C_pad) != (N, C):
        x2 = jnp.pad(x2, ((0, N_pad - N), (0, C_pad - C)))

    grid = (C_pad // tile_c, N_pad // tile_n)

    per_class = pl.pallas_call(
        functools.partial(_dispersion_kernel, inv_n=1.0 / N),
        out_shape=jax.ShapeDtypeStruct((1, C_pad), jnp.float32),
        grid_spec=pltpu.PrefetchScalarGridSpec(
            num_scalar_prefetch=0,
            grid=grid,
            in_specs=[pl.BlockSpec((tile_n, tile_c), lambda j, i: (i, j))],
            out_specs=pl.BlockSpec((1, tile_c), lambda j, i: (0, j)),
            scratch_shapes=[pltpu.VMEM((1, tile_c), jnp.float32)],
        ),
        compiler_params=pltpu.CompilerParams(
            # C tiles are independent -> parallel (megacore on v7x);
            # batch tiles accumulate into scratch/output -> arbitrary (last).
            dimension_semantics=("parallel", "arbitrary"),
        ),
        cost_estimate=pl.CostEstimate(
            flops=2 * N_pad * C_pad,
            transcendentals=C_pad,
            bytes_accessed=N_pad * C_pad * itemsize + 4 * C_pad,
        ),
    )(x2)

    # Tiny final reduction (C values) in f32 in the wrapper.
    return jnp.sum(per_class)


def dispersion_loss_ref(out):
    x = out.astype(jnp.float32).reshape(out.shape[0], -1)
    avg = jnp.mean(x, axis=0)
    return jnp.sum(avg * jnp.log(avg + 1e-5))


if __name__ == "__main__":
    key = jax.random.PRNGKey(0)
    # Small, ragged shapes to exercise both padding paths (N not /8, C not /128).
    N, C = 6, 200
    x = jax.random.uniform(key, (N, C), dtype=jnp.float32, minval=0.0, maxval=1.0)

    loss = jax.block_until_ready(dispersion_loss(x))
    ref = jax.block_until_ready(dispersion_loss_ref(x))

    assert jnp.allclose(loss, ref, rtol=1e-5, atol=1e-5), (loss, ref)
    print("KERNEL_OK")
</pallas_src>

<mosaic_0001>
module attributes {stable_mosaic.version = 11 : i64} {
  func.func @_dispersion_kernel(%arg0: i32, %arg1: i32, %arg2: memref<8x256xf32, #tpu.memory_space<vmem>>, %arg3: memref<1x256xf32, #tpu.memory_space<vmem>>, %arg4: memref<1x256xf32, #tpu.memory_space<vmem>>) attributes {dimension_semantics = [#tpu.dimension_semantics<parallel>, #tpu.dimension_semantics<arbitrary>], iteration_bounds = array<i64: 1, 1>, scalar_prefetch = 0 : i64, scratch_operands = 1 : i64, tpu.core_type = #tpu.core_type<tc>, window_params = [{transform_indices = @transform_0, window_bounds = array<i64: 8, 256>}, {transform_indices = @transform_1, window_bounds = array<i64: 1, 256>}]} {
    %c0_i32 = arith.constant 0 : i32
    %0 = arith.cmpi eq, %arg1, %c0_i32 : i32
    %1 = arith.extui %0 : i1 to i32
    %c0_i32_0 = arith.constant 0 : i32
    %2 = arith.cmpi ne, %1, %c0_i32_0 : i32
    scf.if %2 {
      %cst_8 = arith.constant 0.000000e+00 : f32
      %12 = vector.broadcast %cst_8 : f32 to vector<1x256xf32>
      %c0_9 = arith.constant 0 : index
      %c0_10 = arith.constant 0 : index
      %13 = vector.load %arg4[%c0_9, %c0_10] : memref<1x256xf32, #tpu.memory_space<vmem>>, vector<1x256xf32>
      tpu.vector_store %arg4[%c0_9, %c0_10], %12 {strides = array<i32>} : memref<1x256xf32, #tpu.memory_space<vmem>>, vector<1x256xf32>,
    } else {
    }
    %c0 = arith.constant 0 : index
    %c0_1 = arith.constant 0 : index
    %3 = vector.load %arg2[%c0, %c0_1] : memref<8x256xf32, #tpu.memory_space<vmem>>, vector<8x256xf32>
    %c0_2 = arith.constant 0 : index
    %c0_3 = arith.constant 0 : index
    %4 = vector.load %arg4[%c0_2, %c0_3] : memref<1x256xf32, #tpu.memory_space<vmem>>, vector<1x256xf32>
    %cst = arith.constant dense<0.000000e+00> : vector<256xf32>
    %5 = vector.multi_reduction <add>, %3, %cst [0] : vector<8x256xf32> to vector<256xf32>
    %6 = vector.shape_cast %5 : vector<256xf32> to vector<1x256xf32>
    %7 = arith.addf %4, %6 : vector<1x256xf32>
    %c0_4 = arith.constant 0 : index
    %c0_5 = arith.constant 0 : index
    %8 = vector.load %arg4[%c0_4, %c0_5] : memref<1x256xf32, #tpu.memory_space<vmem>>, vector<1x256xf32>
    tpu.vector_store %arg4[%c0_4, %c0_5], %7 {strides = array<i32>} : memref<1x256xf32, #tpu.memory_space<vmem>>, vector<1x256xf32>,
    %c0_i32_6 = arith.constant 0 : i32
    %9 = arith.cmpi eq, %arg1, %c0_i32_6 : i32
    %10 = arith.extui %9 : i1 to i32
    %c0_i32_7 = arith.constant 0 : i32
    %11 = arith.cmpi ne, %10, %c0_i32_7 : i32
    scf.if %11 {
      %c0_8 = arith.constant 0 : index
      %c0_9 = arith.constant 0 : index
      %12 = vector.load %arg4[%c0_8, %c0_9] : memref<1x256xf32, #tpu.memory_space<vmem>>, vector<1x256xf32>
      %cst_10 = arith.constant 0.166666672 : f32
      %13 = vector.broadcast %cst_10 : f32 to vector<1x256xf32>
      %14 = arith.mulf %12, %13 : vector<1x256xf32>
      %cst_11 = arith.constant 9.99999974E-6 : f32
      %15 = vector.broadcast %cst_11 : f32 to vector<1x256xf32>
      %16 = arith.addf %14, %15 : vector<1x256xf32>
      %17 = math.log %16 : vector<1x256xf32>
      %18 = arith.mulf %14, %17 : vector<1x256xf32>
      %c0_12 = arith.constant 0 : index
      %c0_13 = arith.constant 0 : index
      %19 = vector.load %arg3[%c0_12, %c0_13] : memref<1x256xf32, #tpu.memory_space<vmem>>, vector<1x256xf32>
      tpu.vector_store %arg3[%c0_12, %c0_13], %18 {strides = array<i32>} : memref<1x256xf32, #tpu.memory_space<vmem>>, vector<1x256xf32>,
    } else {
    }
    return
  }
  func.func @transform_0(%arg0: i32, %arg1: i32) -> (i32, i32) {
    %c0_i32 = arith.constant 0 : i32
    return %arg1, %arg0 : i32, i32
  }
  func.func @transform_1(%arg0: i32, %arg1: i32) -> (i32, i32) {
    %c0_i32 = arith.constant 0 : i32
    %c0_i32_0 = arith.constant 0 : i32
    return %c0_i32, %arg0 : i32, i32
  }
}

</mosaic_0001>

<llo_original>
// kernel: tpu_custom_call.1
$region0: #{tpu_custom_call.1}
  #allocation0 [shape = 'u32[]', space=smem, size = 0x4, offset = 0x4, fixed_abs, tag = 'smem constant byte address 0x4 - core index']
  #allocation1 [shape = 'u32[144,128]{1,0:T(1,128)}', space=vmem, size = 0x12000, scoped, tag = 'internal scratch']
  #allocation2 [shape = 'f32[1,256]{1,0:T(1,128)}', space=vmem, size = 0x400, scoped, tag = 'scratch operand']
  %s0 = inlined_call_operand.hbm [shape: f32[8,256], index: 0, kind: input, shape index: {}]
  %s1 = inlined_call_operand.hbm [shape: f32[1,256], index: 1, kind: output, shape index: {}]
  %s2 = sld [smem:[#allocation0]]
  $region26: #{tpu_custom_call.1} parent=0
    _
  %s4 = ssub.s32 1, %s2
  %s5 = scalar_select 0, %s4, %s2
  $region1: #{tpu_custom_call.1} parent=0
    #allocation3 [shape = 'u8[8192]{0}', space=vmem, size = 0x2000, scoped, tag = 'input window, operand 0, single buffered']
    #allocation4 [shape = 's32[1]{0}', space=sflag, size = 0x4, scoped, tag = 'scoped memory for tpu_custom_call.1']
    #allocation5 [shape = 's32[1]{0}', space=sflag, size = 0x4, scoped, tag = 'scoped memory for tpu_custom_call.1']
    #allocation6 [shape = 'u8[1024]{0}', space=vmem, size = 0x400, scoped, tag = 'output window, operand 0, single buffered']
    %6 = vsyncpa [#allocation4], 0
    %7 = vsyncpa [#allocation5], 0
    // Predicated region
    $region2: #{tpu_custom_call.1} parent=1 // pred_check
      _
    $region3: #{tpu_custom_call.1} parent=1 // pred_check_branch
      %9 = sbr.rel (0) target = $region5
    $region4: #{tpu_custom_call.1} parent=1 // pred_region
      %s11 = ssub.s32 256, 256
      %12 = vsyncadd [#allocation4], %s11
      %s14 = sshll.u32 [#allocation3], 4
      %s15 = int_to_ptr.vmem [resolvable:$true] %s14
      %17 = dma.hbm_to_vmem [thread:$0]  %s0, 256, %s15, [#allocation4]
    $region5: #{tpu_custom_call.1} parent=1 // pred_fallthru
      _
    // Predicated region
    $region6: #{tpu_custom_call.1} parent=1 // pred_check
      _
    $region7: #{tpu_custom_call.1} parent=1 // pred_check_branch
      %19 = sbr.rel (0) target = $region9
    $region8: #{tpu_custom_call.1} parent=1 // pred_region
      %20 = dma.done [#allocation4], 256
    $region9: #{tpu_custom_call.1} parent=1 // pred_fallthru
      _
    %p21 = scmp.eq.s32.totalorder 0, 0
    // Predicated region
    $region10: #{tpu_custom_call.1} parent=1 // pred_check
      %p22 = pneg %p21
    $region11: #{tpu_custom_call.1} parent=1 // pred_check_branch
      %24 = sbr.rel (%p22) target = $region13
    $region12: #{tpu_custom_call.1} parent=1 // pred_region
      %v25 = vlaneseq
      %vm26 = vcmp.ge.s32.totalorder %v25, 0
      %vm27 = vcmp.lt.s32.totalorder %v25, 256
      %vm28 = vmand %vm26, %vm27
      %29 = vst.msk [vmem:[#allocation2] sm:$0x3] %vm28, 0.0
    $region13: #{tpu_custom_call.1} parent=1 // pred_fallthru
      _
    %v30 = vld [vmem:[#allocation3] sm:$0xff]
    %v31 = vld [vmem:[#allocation3 + $0x8] sm:$0xff]
    %v32 = vld [vmem:[#allocation2] sm:$0x3]
    %v33 = vrot.slane %v30, 4
    %v34 = vadd.f32 %v30, %v33
    %v35 = vrot.slane %v34, 2
    %v36 = vadd.f32 %v34, %v35
    %v37 = vrot.slane %v36, 1
    %v38 = vadd.f32 %v36, %v37
    %v39 = vrot.slane %v31, 4
    %v40 = vadd.f32 %v31, %v39
    %v41 = vrot.slane %v40, 2
    %v42 = vadd.f32 %v40, %v41
    %v43 = vrot.slane %v42, 1
    %v44 = vadd.f32 %v42, %v43
    %v47 = vcombine.low %v38, %v44
    %v49 = vunpack.c.l.s4 1966171168
    %v50 = vunpack.c.0.s8 %v49
    %v51 = vlaneseq
    %v52 = vshrl.u32 %v51, 7
    %v53 = vsub.s32 %v50, %v52
    %v54 = vrot.slane %v47, %v53
    %v56 = vunpack.c.l.s4 1966171168
    %v57 = vunpack.c.0.s8 %v56
    %v58 = vlaneseq
    %v59 = vshrl.u32 %v58, 7
    %v60 = vsub.s32 %v57, %v59
    %v61 = vrot.slane %v54, %v60
    %v63 = vadd.f32 %v32, %v61
    %v64 = vlaneseq
    %vm65 = vcmp.ge.s32.totalorder %v64, 0
    %vm66 = vcmp.lt.s32.totalorder %v64, 256
    %vm67 = vmand %vm65, %vm66
    %68 = vst.msk [vmem:[#allocation2] sm:$0x3] %vm67, %v63
    // Predicated region
    $region14: #{tpu_custom_call.1} parent=1 // pred_check
      %p69 = pneg %p21
    $region15: #{tpu_custom_call.1} parent=1 // pred_check_branch
      %71 = sbr.rel (%p69) target = $region17
    $region16: #{tpu_custom_call.1} parent=1 // pred_region
      %v72 = vld [vmem:[#allocation2] sm:$0x3]
      %v73 = vmul.f32 %v72, 0.16666667
      %v74 = vadd.f32 %v73, 1e-05
      %v75 = vlog2.pop %v74
      %v76 = vmul.f32 %v75, 0.6931472
      %v77 = vmul.f32 %v73, %v76
      %78 = vst.msk [vmem:[#allocation6] sm:$0x3] %vm67, %v77
    $region17: #{tpu_custom_call.1} parent=1 // pred_fallthru
      _
    // Predicated region
    $region18: #{tpu_custom_call.1} parent=1 // pred_check
      _
    $region19: #{tpu_custom_call.1} parent=1 // pred_check_branch
      %80 = sbr.rel (0) target = $region21
    $region20: #{tpu_custom_call.1} parent=1 // pred_region
      %s82 = ssub.s32 32, 32
      %83 = vsyncadd [#allocation5], %s82
      %s85 = sshll.u32 [#allocation6], 4
      %s86 = int_to_ptr.vmem [resolvable:$true] %s85
      %88 = dma.vmem_to_hbm [thread:$0]  %s86, 32, %s1, [#allocation5]
    $region21: #{tpu_custom_call.1} parent=1 // pred_fallthru
      _
    // Predicated region
    $region22: #{tpu_custom_call.1} parent=1 // pred_check
      _
    $region23: #{tpu_custom_call.1} parent=1 // pred_check_branch
      %90 = sbr.rel (0) target = $region25
    $region24: #{tpu_custom_call.1} parent=1 // pred_region
      %91 = dma.done [#allocation5], 32
    $region25: #{tpu_custom_call.1} parent=1 // pred_fallthru
      _
    %92 = vsyncpa [#allocation4], 1
    %93 = vsyncpa [#allocation5], 1

</llo_original>
